<compile_context>
chip_gen: v7x
topology: tpu7x:2x2x1
jax: 0.10.0
libtpu: 0.0.40
codegen_flags: <defaults>
</compile_context>

<pallas_src>
import functools

import jax
import jax.numpy as jnp
from jax.experimental import pallas as pl
from jax.experimental.pallas import tpu as pltpu

FEAT_COMP_DIM = 102
FEAT_LOC_DIM = 23
COMMON_DIM = 64
EMB_DIM = 64
EMB_NUM = 2405
NEG_SLOPE = 0.01  # nn.LeakyReLU default

FEAT_COMP_PAD = 128   # 102 -> 128 (zero-padded)
FEAT_LOC_PAD = 64     # 23  -> 64  (zero-padded)
OUT_SLAB = 256        # comp(64) | loc(64) | comp_loc(64) | logits padded to 64


def _round_up(x, m):
    return ((x + m - 1) // m) * m


def _leaky_relu(x):
    return jnp.where(x > 0, x, NEG_SLOPE * x)


def _mlp_kernel(
    feat_comp_ref, feat_loc_ref, emb_ref,
    w1_ref, b1_ref, w2_ref, b2_ref, w3_ref, b3_ref,     # net_comp
    wl_ref, bl_ref,                                     # net_loc_base
    wu_b_ref, wu_e_ref, bu_ref,                         # net_loc_upper (split)
    ws_c_ref, ws_l_ref, bs_ref,                         # net_shared   (split)
    wc_ref,                                             # classifier (padded, no bias)
    slab_ref,
):
    f32 = jnp.float32

    # ---- net_comp: 128(pad of 102) -> 256 -> 128 -> 64, LeakyReLU each ----
    x = feat_comp_ref[...]
    h = _leaky_relu(jnp.dot(x, w1_ref[...], preferred_element_type=f32) + b1_ref[...])
    h = _leaky_relu(jnp.dot(h, w2_ref[...], preferred_element_type=f32) + b2_ref[...])
    comp = _leaky_relu(jnp.dot(h, w3_ref[...], preferred_element_type=f32) + b3_ref[...])

    # ---- net_loc_base: 64(pad of 23) -> 64, LeakyReLU ----
    base = _leaky_relu(
        jnp.dot(feat_loc_ref[...], wl_ref[...], preferred_element_type=f32)
        + bl_ref[...])

    # ---- net_loc_upper on cat(base, emb): split-weight accumulation ----
    loc = _leaky_relu(
        jnp.dot(base, wu_b_ref[...], preferred_element_type=f32)
        + jnp.dot(emb_ref[...], wu_e_ref[...], preferred_element_type=f32)
        + bu_ref[...])

    # ---- net_shared on cat(comp, loc): split-weight accumulation ----
    cl = _leaky_relu(
        jnp.dot(comp, ws_c_ref[...], preferred_element_type=f32)
        + jnp.dot(loc, ws_l_ref[...], preferred_element_type=f32)
        + bs_ref[...])

    # ---- classifier: 64 -> 2, zero-padded to 64 output lanes (no bias) ----
    logits_pad = jnp.dot(cl, wc_ref[...], preferred_element_type=f32)

    # ---- assemble lane-dense output slab (single wide writeback DMA) ----
    slab_ref[:, 0:64] = comp
    slab_ref[:, 64:128] = loc
    slab_ref[:, 128:192] = cl
    slab_ref[:, 192:256] = logits_pad


def init_params(key):
    """Deterministic synthetic parameter init (shapes from the module __init__)."""
    ks = jax.random.split(key, 16)

    def lin(k, din, dout):
        scale = 1.0 / jnp.sqrt(jnp.float32(din))
        w = jax.random.uniform(k, (din, dout), jnp.float32, -scale, scale)
        b = jax.random.uniform(jax.random.fold_in(k, 1), (1, dout),
                               jnp.float32, -scale, scale)
        return w, b

    w1, b1 = lin(ks[0], FEAT_COMP_DIM, 256)
    w2, b2 = lin(ks[1], 256, 128)
    w3, b3 = lin(ks[2], 128, COMMON_DIM)
    wl, bl = lin(ks[3], FEAT_LOC_DIM, 64)
    wu, bu = lin(ks[4], 64 + EMB_DIM, COMMON_DIM)
    ws, bs = lin(ks[5], 2 * COMMON_DIM, COMMON_DIM)
    wc = jax.random.uniform(ks[6], (COMMON_DIM, 2), jnp.float32,
                            -1.0 / 8.0, 1.0 / 8.0)
    emb_table = jax.random.normal(ks[7], (EMB_NUM, EMB_DIM), jnp.float32)
    return dict(w1=w1, b1=b1, w2=w2, b2=b2, w3=w3, b3=b3,
                wl=wl, bl=bl, wu=wu, bu=bu, ws=ws, bs=bs, wc=wc,
                emb_table=emb_table)


@functools.partial(jax.jit, static_argnames=("tile_b",))
def naive_dl_forward(params, feat_comp, feat_loc, id_loc, tile_b=256):
    B = feat_comp.shape[0]
    assert feat_comp.shape[1] == FEAT_COMP_DIM
    assert feat_loc.shape[1] == FEAT_LOC_DIM

    # Effective batch tile: large for throughput, but never bigger than the
    # (8-row-aligned) batch itself.  Batch is zero-padded to a tile multiple.
    tile = min(tile_b, _round_up(B, 8))
    Bp = _round_up(B, tile)
    grid = (Bp // tile,)

    # ---- input prep (zero-padding to aligned shapes) ----
    fc = jnp.pad(feat_comp, ((0, Bp - B), (0, FEAT_COMP_PAD - FEAT_COMP_DIM)))
    fl = jnp.pad(feat_loc, ((0, Bp - B), (0, FEAT_LOC_PAD - FEAT_LOC_DIM)))

    # Embedding lookup (plain-JAX gather glue), mirrors net_emb(id_loc).view(-1, 64)
    emb = jnp.take(params["emb_table"], id_loc.reshape(-1), axis=0)
    emb = jnp.pad(emb.reshape(-1, EMB_DIM), ((0, Bp - B), (0, 0)))

    # ---- weight prep: pad K dims, split concat-weights, pad classifier ----
    w1p = jnp.pad(params["w1"], ((0, FEAT_COMP_PAD - FEAT_COMP_DIM), (0, 0)))
    wlp = jnp.pad(params["wl"], ((0, FEAT_LOC_PAD - FEAT_LOC_DIM), (0, 0)))
    wu_b = params["wu"][:64, :]          # acts on base_feat_loc
    wu_e = params["wu"][64:, :]          # acts on embedding
    ws_c = params["ws"][:64, :]          # acts on comp_feat
    ws_l = params["ws"][64:, :]          # acts on loc_feat
    wcp = jnp.pad(params["wc"], ((0, 0), (0, 64 - 2)))   # logits padded to 64 lanes

    def batch_spec(d):
        return pl.BlockSpec((tile, d), lambda i: (i, 0))

    def full_spec(shape):
        return pl.BlockSpec(shape, lambda i: (0, 0))

    in_specs = [
        batch_spec(FEAT_COMP_PAD),                    # feat_comp (padded)
        batch_spec(FEAT_LOC_PAD),                     # feat_loc (padded)
        batch_spec(EMB_DIM),                          # embedded loc ids
        full_spec((FEAT_COMP_PAD, 256)), full_spec((1, 256)),
        full_spec((256, 128)),           full_spec((1, 128)),
        full_spec((128, COMMON_DIM)),    full_spec((1, COMMON_DIM)),
        full_spec((FEAT_LOC_PAD, 64)),   full_spec((1, 64)),
        full_spec((64, COMMON_DIM)),                          # wu_base
        full_spec((EMB_DIM, COMMON_DIM)),                     # wu_emb
        full_spec((1, COMMON_DIM)),
        full_spec((COMMON_DIM, COMMON_DIM)),                  # ws_comp
        full_spec((COMMON_DIM, COMMON_DIM)),                  # ws_loc
        full_spec((1, COMMON_DIM)),
        full_spec((COMMON_DIM, 64)),                          # wc (padded)
    ]
    out_specs = pl.BlockSpec((tile, OUT_SLAB), lambda i: (i, 0))
    out_shape = jax.ShapeDtypeStruct((Bp, OUT_SLAB), jnp.float32)

    slab = pl.pallas_call(
        _mlp_kernel,
        out_shape=out_shape,
        grid_spec=pltpu.PrefetchScalarGridSpec(
            num_scalar_prefetch=0,
            grid=grid,
            in_specs=in_specs,
            out_specs=out_specs,
        ),
        compiler_params=pltpu.CompilerParams(
            dimension_semantics=("parallel",)),
    )(
        fc, fl, emb,
        w1p, params["b1"], params["w2"], params["b2"],
        params["w3"], params["b3"],
        wlp, params["bl"],
        wu_b, wu_e, params["bu"],
        ws_c, ws_l, params["bs"],
        wcp,
    )

    return {
        "comp_feat": slab[:B, 0:64],
        "loc_feat": slab[:B, 64:128],
        "comp_loc_feat": slab[:B, 128:192],
        "outputs": slab[:B, 192:194],
    }


def _reference_forward(params, feat_comp, feat_loc, id_loc):
    """Pure-JAX reference for correctness check (mirrors the PyTorch module)."""
    lrelu = lambda x: jnp.where(x > 0, x, NEG_SLOPE * x)
    h = lrelu(feat_comp @ params["w1"] + params["b1"])
    h = lrelu(h @ params["w2"] + params["b2"])
    comp = lrelu(h @ params["w3"] + params["b3"])
    base = lrelu(feat_loc @ params["wl"] + params["bl"])
    emb = jnp.take(params["emb_table"], id_loc.reshape(-1), axis=0)
    loc = lrelu(jnp.concatenate([base, emb], axis=1) @ params["wu"] + params["bu"])
    cl = lrelu(jnp.concatenate([comp, loc], axis=1) @ params["ws"] + params["bs"])
    out = cl @ params["wc"]
    return {"comp_feat": comp, "loc_feat": loc,
            "comp_loc_feat": cl, "outputs": out}


if __name__ == "__main__":
    key = jax.random.PRNGKey(0)
    pkey, k1, k2, k3 = jax.random.split(key, 4)

    params = init_params(pkey)

    B = 8  # small batch for the self-test (any B works: wrapper pads/slices)
    feat_comp = jax.random.normal(k1, (B, FEAT_COMP_DIM), jnp.float32)
    feat_loc = jax.random.normal(k2, (B, FEAT_LOC_DIM), jnp.float32)
    id_loc = jax.random.randint(k3, (B,), 0, EMB_NUM, dtype=jnp.int32)

    result = naive_dl_forward(params, feat_comp, feat_loc, id_loc)
    jax.block_until_ready(result)

    ref = _reference_forward(params, feat_comp, feat_loc, id_loc)
    for name in ("comp_feat", "loc_feat", "comp_loc_feat", "outputs"):
        err = jnp.max(jnp.abs(result[name] - ref[name]))
        assert err < 1e-3, f"{name} mismatch: {err}"

    print("KERNEL_OK")
</pallas_src>

<mosaic_0001>
module attributes {stable_mosaic.version = 11 : i64} {
  func.func @_mlp_kernel(%arg0: i32, %arg1: memref<8x128xf32, #tpu.memory_space<vmem>>, %arg2: memref<8x64xf32, #tpu.memory_space<vmem>>, %arg3: memref<8x64xf32, #tpu.memory_space<vmem>>, %arg4: memref<128x256xf32, #tpu.memory_space<vmem>>, %arg5: memref<1x256xf32, #tpu.memory_space<vmem>>, %arg6: memref<256x128xf32, #tpu.memory_space<vmem>>, %arg7: memref<1x128xf32, #tpu.memory_space<vmem>>, %arg8: memref<128x64xf32, #tpu.memory_space<vmem>>, %arg9: memref<1x64xf32, #tpu.memory_space<vmem>>, %arg10: memref<64x64xf32, #tpu.memory_space<vmem>>, %arg11: memref<1x64xf32, #tpu.memory_space<vmem>>, %arg12: memref<64x64xf32, #tpu.memory_space<vmem>>, %arg13: memref<64x64xf32, #tpu.memory_space<vmem>>, %arg14: memref<1x64xf32, #tpu.memory_space<vmem>>, %arg15: memref<64x64xf32, #tpu.memory_space<vmem>>, %arg16: memref<64x64xf32, #tpu.memory_space<vmem>>, %arg17: memref<1x64xf32, #tpu.memory_space<vmem>>, %arg18: memref<64x64xf32, #tpu.memory_space<vmem>>, %arg19: memref<8x256xf32, #tpu.memory_space<vmem>>) attributes {dimension_semantics = [#tpu.dimension_semantics<parallel>], iteration_bounds = array<i64: 1>, scalar_prefetch = 0 : i64, scratch_operands = 0 : i64, tpu.core_type = #tpu.core_type<tc>, window_params = [{transform_indices = @transform_0, window_bounds = array<i64: 8, 128>}, {transform_indices = @transform_1, window_bounds = array<i64: 8, 64>}, {transform_indices = @transform_2, window_bounds = array<i64: 8, 64>}, {pipeline_mode = #tpu.pipeline_mode<synchronous>, transform_indices = @transform_3, window_bounds = array<i64: 128, 256>}, {pipeline_mode = #tpu.pipeline_mode<synchronous>, transform_indices = @transform_4, window_bounds = array<i64: 1, 256>}, {pipeline_mode = #tpu.pipeline_mode<synchronous>, transform_indices = @transform_5, window_bounds = array<i64: 256, 128>}, {pipeline_mode = #tpu.pipeline_mode<synchronous>, transform_indices = @transform_6, window_bounds = array<i64: 1, 128>}, {pipeline_mode = #tpu.pipeline_mode<synchronous>, transform_indices = @transform_7, window_bounds = array<i64: 128, 64>}, {pipeline_mode = #tpu.pipeline_mode<synchronous>, transform_indices = @transform_8, window_bounds = array<i64: 1, 64>}, {pipeline_mode = #tpu.pipeline_mode<synchronous>, transform_indices = @transform_9, window_bounds = array<i64: 64, 64>}, {pipeline_mode = #tpu.pipeline_mode<synchronous>, transform_indices = @transform_10, window_bounds = array<i64: 1, 64>}, {pipeline_mode = #tpu.pipeline_mode<synchronous>, transform_indices = @transform_11, window_bounds = array<i64: 64, 64>}, {pipeline_mode = #tpu.pipeline_mode<synchronous>, transform_indices = @transform_12, window_bounds = array<i64: 64, 64>}, {pipeline_mode = #tpu.pipeline_mode<synchronous>, transform_indices = @transform_13, window_bounds = array<i64: 1, 64>}, {pipeline_mode = #tpu.pipeline_mode<synchronous>, transform_indices = @transform_14, window_bounds = array<i64: 64, 64>}, {pipeline_mode = #tpu.pipeline_mode<synchronous>, transform_indices = @transform_15, window_bounds = array<i64: 64, 64>}, {pipeline_mode = #tpu.pipeline_mode<synchronous>, transform_indices = @transform_16, window_bounds = array<i64: 1, 64>}, {pipeline_mode = #tpu.pipeline_mode<synchronous>, transform_indices = @transform_17, window_bounds = array<i64: 64, 64>}, {transform_indices = @transform_18, window_bounds = array<i64: 8, 256>}]} {
    %c0 = arith.constant 0 : index
    %c0_0 = arith.constant 0 : index
    %0 = vector.load %arg1[%c0, %c0_0] : memref<8x128xf32, #tpu.memory_space<vmem>>, vector<8x128xf32>
    %c0_1 = arith.constant 0 : index
    %c0_2 = arith.constant 0 : index
    %1 = vector.load %arg4[%c0_1, %c0_2] : memref<128x256xf32, #tpu.memory_space<vmem>>, vector<128x256xf32>
    %cst = arith.constant dense<0.000000e+00> : vector<8x256xf32>
    %2 = tpu.matmul %0, %1, %cst {dimension_numbers = #tpu.dot_dimension_numbers<[1], [0], [0], [1], [0, 0, 1, 1], [], []>} : vector<8x128xf32>, vector<128x256xf32>, vector<8x256xf32> -> vector<8x256xf32>
    %c0_3 = arith.constant 0 : index
    %c0_4 = arith.constant 0 : index
    %3 = vector.load %arg5[%c0_3, %c0_4] : memref<1x256xf32, #tpu.memory_space<vmem>>, vector<1x256xf32>
    %4 = vector.broadcast %3 : vector<1x256xf32> to vector<8x256xf32>
    %5 = arith.addf %2, %4 : vector<8x256xf32>
    %cst_5 = arith.constant 0.000000e+00 : f32
    %6 = vector.broadcast %cst_5 : f32 to vector<8x256xf32>
    %7 = arith.cmpf ogt, %5, %6 : vector<8x256xf32>
    %cst_6 = arith.constant 0.00999999977 : f32
    %8 = vector.broadcast %cst_6 : f32 to vector<8x256xf32>
    %9 = arith.mulf %8, %5 : vector<8x256xf32>
    %10 = arith.select %7, %5, %9 : vector<8x256xi1>, vector<8x256xf32>
    %c0_7 = arith.constant 0 : index
    %c0_8 = arith.constant 0 : index
    %11 = vector.load %arg6[%c0_7, %c0_8] : memref<256x128xf32, #tpu.memory_space<vmem>>, vector<256x128xf32>
    %cst_9 = arith.constant dense<0.000000e+00> : vector<8x128xf32>
    %12 = tpu.matmul %10, %11, %cst_9 {dimension_numbers = #tpu.dot_dimension_numbers<[1], [0], [0], [1], [0, 0, 1, 1], [], []>} : vector<8x256xf32>, vector<256x128xf32>, vector<8x128xf32> -> vector<8x128xf32>
    %c0_10 = arith.constant 0 : index
    %c0_11 = arith.constant 0 : index
    %13 = vector.load %arg7[%c0_10, %c0_11] : memref<1x128xf32, #tpu.memory_space<vmem>>, vector<1x128xf32>
    %14 = vector.broadcast %13 : vector<1x128xf32> to vector<8x128xf32>
    %15 = arith.addf %12, %14 : vector<8x128xf32>
    %cst_12 = arith.constant 0.000000e+00 : f32
    %16 = vector.broadcast %cst_12 : f32 to vector<8x128xf32>
    %17 = arith.cmpf ogt, %15, %16 : vector<8x128xf32>
    %cst_13 = arith.constant 0.00999999977 : f32
    %18 = vector.broadcast %cst_13 : f32 to vector<8x128xf32>
    %19 = arith.mulf %18, %15 : vector<8x128xf32>
    %20 = arith.select %17, %15, %19 : vector<8x128xi1>, vector<8x128xf32>
    %c0_14 = arith.constant 0 : index
    %c0_15 = arith.constant 0 : index
    %21 = vector.load %arg8[%c0_14, %c0_15] : memref<128x64xf32, #tpu.memory_space<vmem>>, vector<128x64xf32>
    %cst_16 = arith.constant dense<0.000000e+00> : vector<8x64xf32>
    %22 = tpu.matmul %20, %21, %cst_16 {dimension_numbers = #tpu.dot_dimension_numbers<[1], [0], [0], [1], [0, 0, 1, 1], [], []>} : vector<8x128xf32>, vector<128x64xf32>, vector<8x64xf32> -> vector<8x64xf32>
    %c0_17 = arith.constant 0 : index
    %c0_18 = arith.constant 0 : index
    %23 = vector.load %arg9[%c0_17, %c0_18] : memref<1x64xf32, #tpu.memory_space<vmem>>, vector<1x64xf32>
    %24 = vector.broadcast %23 : vector<1x64xf32> to vector<8x64xf32>
    %25 = arith.addf %22, %24 : vector<8x64xf32>
    %cst_19 = arith.constant 0.000000e+00 : f32
    %26 = vector.broadcast %cst_19 : f32 to vector<8x64xf32>
    %27 = arith.cmpf ogt, %25, %26 : vector<8x64xf32>
    %cst_20 = arith.constant 0.00999999977 : f32
    %28 = vector.broadcast %cst_20 : f32 to vector<8x64xf32>
    %29 = arith.mulf %28, %25 : vector<8x64xf32>
    %30 = arith.select %27, %25, %29 : vector<8x64xi1>, vector<8x64xf32>
    %c0_21 = arith.constant 0 : index
    %c0_22 = arith.constant 0 : index
    %31 = vector.load %arg2[%c0_21, %c0_22] : memref<8x64xf32, #tpu.memory_space<vmem>>, vector<8x64xf32>
    %c0_23 = arith.constant 0 : index
    %c0_24 = arith.constant 0 : index
    %32 = vector.load %arg10[%c0_23, %c0_24] : memref<64x64xf32, #tpu.memory_space<vmem>>, vector<64x64xf32>
    %cst_25 = arith.constant dense<0.000000e+00> : vector<8x64xf32>
    %33 = tpu.matmul %31, %32, %cst_25 {dimension_numbers = #tpu.dot_dimension_numbers<[1], [0], [0], [1], [0, 0, 1, 1], [], []>} : vector<8x64xf32>, vector<64x64xf32>, vector<8x64xf32> -> vector<8x64xf32>
    %c0_26 = arith.constant 0 : index
    %c0_27 = arith.constant 0 : index
    %34 = vector.load %arg11[%c0_26, %c0_27] : memref<1x64xf32, #tpu.memory_space<vmem>>, vector<1x64xf32>
    %35 = vector.broadcast %34 : vector<1x64xf32> to vector<8x64xf32>
    %36 = arith.addf %33, %35 : vector<8x64xf32>
    %cst_28 = arith.constant 0.000000e+00 : f32
    %37 = vector.broadcast %cst_28 : f32 to vector<8x64xf32>
    %38 = arith.cmpf ogt, %36, %37 : vector<8x64xf32>
    %cst_29 = arith.constant 0.00999999977 : f32
    %39 = vector.broadcast %cst_29 : f32 to vector<8x64xf32>
    %40 = arith.mulf %39, %36 : vector<8x64xf32>
    %41 = arith.select %38, %36, %40 : vector<8x64xi1>, vector<8x64xf32>
    %c0_30 = arith.constant 0 : index
    %c0_31 = arith.constant 0 : index
    %42 = vector.load %arg12[%c0_30, %c0_31] : memref<64x64xf32, #tpu.memory_space<vmem>>, vector<64x64xf32>
    %cst_32 = arith.constant dense<0.000000e+00> : vector<8x64xf32>
    %43 = tpu.matmul %41, %42, %cst_32 {dimension_numbers = #tpu.dot_dimension_numbers<[1], [0], [0], [1], [0, 0, 1, 1], [], []>} : vector<8x64xf32>, vector<64x64xf32>, vector<8x64xf32> -> vector<8x64xf32>
    %c0_33 = arith.constant 0 : index
    %c0_34 = arith.constant 0 : index
    %44 = vector.load %arg3[%c0_33, %c0_34] : memref<8x64xf32, #tpu.memory_space<vmem>>, vector<8x64xf32>
    %c0_35 = arith.constant 0 : index
    %c0_36 = arith.constant 0 : index
    %45 = vector.load %arg13[%c0_35, %c0_36] : memref<64x64xf32, #tpu.memory_space<vmem>>, vector<64x64xf32>
    %cst_37 = arith.constant dense<0.000000e+00> : vector<8x64xf32>
    %46 = tpu.matmul %44, %45, %cst_37 {dimension_numbers = #tpu.dot_dimension_numbers<[1], [0], [0], [1], [0, 0, 1, 1], [], []>} : vector<8x64xf32>, vector<64x64xf32>, vector<8x64xf32> -> vector<8x64xf32>
    %47 = arith.addf %43, %46 : vector<8x64xf32>
    %c0_38 = arith.constant 0 : index
    %c0_39 = arith.constant 0 : index
    %48 = vector.load %arg14[%c0_38, %c0_39] : memref<1x64xf32, #tpu.memory_space<vmem>>, vector<1x64xf32>
    %49 = vector.broadcast %48 : vector<1x64xf32> to vector<8x64xf32>
    %50 = arith.addf %47, %49 : vector<8x64xf32>
    %cst_40 = arith.constant 0.000000e+00 : f32
    %51 = vector.broadcast %cst_40 : f32 to vector<8x64xf32>
    %52 = arith.cmpf ogt, %50, %51 : vector<8x64xf32>
    %cst_41 = arith.constant 0.00999999977 : f32
    %53 = vector.broadcast %cst_41 : f32 to vector<8x64xf32>
    %54 = arith.mulf %53, %50 : vector<8x64xf32>
    %55 = arith.select %52, %50, %54 : vector<8x64xi1>, vector<8x64xf32>
    %c0_42 = arith.constant 0 : index
    %c0_43 = arith.constant 0 : index
    %56 = vector.load %arg15[%c0_42, %c0_43] : memref<64x64xf32, #tpu.memory_space<vmem>>, vector<64x64xf32>
    %cst_44 = arith.constant dense<0.000000e+00> : vector<8x64xf32>
    %57 = tpu.matmul %30, %56, %cst_44 {dimension_numbers = #tpu.dot_dimension_numbers<[1], [0], [0], [1], [0, 0, 1, 1], [], []>} : vector<8x64xf32>, vector<64x64xf32>, vector<8x64xf32> -> vector<8x64xf32>
    %c0_45 = arith.constant 0 : index
    %c0_46 = arith.constant 0 : index
    %58 = vector.load %arg16[%c0_45, %c0_46] : memref<64x64xf32, #tpu.memory_space<vmem>>, vector<64x64xf32>
    %cst_47 = arith.constant dense<0.000000e+00> : vector<8x64xf32>
    %59 = tpu.matmul %55, %58, %cst_47 {dimension_numbers = #tpu.dot_dimension_numbers<[1], [0], [0], [1], [0, 0, 1, 1], [], []>} : vector<8x64xf32>, vector<64x64xf32>, vector<8x64xf32> -> vector<8x64xf32>
    %60 = arith.addf %57, %59 : vector<8x64xf32>
    %c0_48 = arith.constant 0 : index
    %c0_49 = arith.constant 0 : index
    %61 = vector.load %arg17[%c0_48, %c0_49] : memref<1x64xf32, #tpu.memory_space<vmem>>, vector<1x64xf32>
    %62 = vector.broadcast %61 : vector<1x64xf32> to vector<8x64xf32>
    %63 = arith.addf %60, %62 : vector<8x64xf32>
    %cst_50 = arith.constant 0.000000e+00 : f32
    %64 = vector.broadcast %cst_50 : f32 to vector<8x64xf32>
    %65 = arith.cmpf ogt, %63, %64 : vector<8x64xf32>
    %cst_51 = arith.constant 0.00999999977 : f32
    %66 = vector.broadcast %cst_51 : f32 to vector<8x64xf32>
    %67 = arith.mulf %66, %63 : vector<8x64xf32>
    %68 = arith.select %65, %63, %67 : vector<8x64xi1>, vector<8x64xf32>
    %c0_52 = arith.constant 0 : index
    %c0_53 = arith.constant 0 : index
    %69 = vector.load %arg18[%c0_52, %c0_53] : memref<64x64xf32, #tpu.memory_space<vmem>>, vector<64x64xf32>
    %cst_54 = arith.constant dense<0.000000e+00> : vector<8x64xf32>
    %70 = tpu.matmul %68, %69, %cst_54 {dimension_numbers = #tpu.dot_dimension_numbers<[1], [0], [0], [1], [0, 0, 1, 1], [], []>} : vector<8x64xf32>, vector<64x64xf32>, vector<8x64xf32> -> vector<8x64xf32>
    %c0_55 = arith.constant 0 : index
    %c0_56 = arith.constant 0 : index
    %71 = vector.load %arg19[%c0_55, %c0_56] : memref<8x256xf32, #tpu.memory_space<vmem>>, vector<8x64xf32>
    tpu.vector_store %arg19[%c0_55, %c0_56], %30 {strides = array<i32>} : memref<8x256xf32, #tpu.memory_space<vmem>>, vector<8x64xf32>,
    %c0_57 = arith.constant 0 : index
    %c64 = arith.constant 64 : index
    %72 = vector.load %arg19[%c0_57, %c64] : memref<8x256xf32, #tpu.memory_space<vmem>>, vector<8x64xf32>
    tpu.vector_store %arg19[%c0_57, %c64], %55 {strides = array<i32>} : memref<8x256xf32, #tpu.memory_space<vmem>>, vector<8x64xf32>,
    %c0_58 = arith.constant 0 : index
    %c128 = arith.constant 128 : index
    %73 = vector.load %arg19[%c0_58, %c128] : memref<8x256xf32, #tpu.memory_space<vmem>>, vector<8x64xf32>
    tpu.vector_store %arg19[%c0_58, %c128], %68 {strides = array<i32>} : memref<8x256xf32, #tpu.memory_space<vmem>>, vector<8x64xf32>,
    %c0_59 = arith.constant 0 : index
    %c192 = arith.constant 192 : index
    %74 = vector.load %arg19[%c0_59, %c192] : memref<8x256xf32, #tpu.memory_space<vmem>>, vector<8x64xf32>
    tpu.vector_store %arg19[%c0_59, %c192], %70 {strides = array<i32>} : memref<8x256xf32, #tpu.memory_space<vmem>>, vector<8x64xf32>,
    return
  }
  func.func @transform_0(%arg0: i32) -> (i32, i32) {
    %c0_i32 = arith.constant 0 : i32
    %c0_i32_0 = arith.constant 0 : i32
    return %arg0, %c0_i32 : i32, i32
  }
  func.func @transform_1(%arg0: i32) -> (i32, i32) {
    %c0_i32 = arith.constant 0 : i32
    %c0_i32_0 = arith.constant 0 : i32
    return %arg0, %c0_i32 : i32, i32
  }
  func.func @transform_2(%arg0: i32) -> (i32, i32) {
    %c0_i32 = arith.constant 0 : i32
    %c0_i32_0 = arith.constant 0 : i32
    return %arg0, %c0_i32 : i32, i32
  }
  func.func @transform_3(%arg0: i32) -> (i32, i32) {
    %c0_i32 = arith.constant 0 : i32
    %c0_i32_0 = arith.constant 0 : i32
    %c0_i32_1 = arith.constant 0 : i32
    return %c0_i32, %c0_i32_0 : i32, i32
  }
  func.func @transform_4(%arg0: i32) -> (i32, i32) {
    %c0_i32 = arith.constant 0 : i32
    %c0_i32_0 = arith.constant 0 : i32
    %c0_i32_1 = arith.constant 0 : i32
    return %c0_i32, %c0_i32_0 : i32, i32
  }
  func.func @transform_5(%arg0: i32) -> (i32, i32) {
    %c0_i32 = arith.constant 0 : i32
    %c0_i32_0 = arith.constant 0 : i32
    %c0_i32_1 = arith.constant 0 : i32
    return %c0_i32, %c0_i32_0 : i32, i32
  }
  func.func @transform_6(%arg0: i32) -> (i32, i32) {
    %c0_i32 = arith.constant 0 : i32
    %c0_i32_0 = arith.constant 0 : i32
    %c0_i32_1 = arith.constant 0 : i32
    return %c0_i32, %c0_i32_0 : i32, i32
  }
  func.func @transform_7(%arg0: i32) -> (i32, i32) {
    %c0_i32 = arith.constant 0 : i32
    %c0_i32_0 = arith.constant 0 : i32
    %c0_i32_1 = arith.constant 0 : i32
    return %c0_i32, %c0_i32_0 : i32, i32
  }
  func.func @transform_8(%arg0: i32) -> (i32, i32) {
    %c0_i32 = arith.constant 0 : i32
    %c0_i32_0 = arith.constant 0 : i32
    %c0_i32_1 = arith.constant 0 : i32
    return %c0_i32, %c0_i32_0 : i32, i32
  }
  func.func @transform_9(%arg0: i32) -> (i32, i32) {
    %c0_i32 = arith.constant 0 : i32
    %c0_i32_0 = arith.constant 0 : i32
    %c0_i32_1 = arith.constant 0 : i32
    return %c0_i32, %c0_i32_0 : i32, i32
  }
  func.func @transform_10(%arg0: i32) -> (i32, i32) {
    %c0_i32 = arith.constant 0 : i32
    %c0_i32_0 = arith.constant 0 : i32
    %c0_i32_1 = arith.constant 0 : i32
    return %c0_i32, %c0_i32_0 : i32, i32
  }
  func.func @transform_11(%arg0: i32) -> (i32, i32) {
    %c0_i32 = arith.constant 0 : i32
    %c0_i32_0 = arith.constant 0 : i32
    %c0_i32_1 = arith.constant 0 : i32
    return %c0_i32, %c0_i32_0 : i32, i32
  }
  func.func @transform_12(%arg0: i32) -> (i32, i32) {
    %c0_i32 = arith.constant 0 : i32
    %c0_i32_0 = arith.constant 0 : i32
    %c0_i32_1 = arith.constant 0 : i32
    return %c0_i32, %c0_i32_0 : i32, i32
  }
  func.func @transform_13(%arg0: i32) -> (i32, i32) {
    %c0_i32 = arith.constant 0 : i32
    %c0_i32_0 = arith.constant 0 : i32
    %c0_i32_1 = arith.constant 0 : i32
    return %c0_i32, %c0_i32_0 : i32, i32
  }
  func.func @transform_14(%arg0: i32) -> (i32, i32) {
    %c0_i32 = arith.constant 0 : i32
    %c0_i32_0 = arith.constant 0 : i32
    %c0_i32_1 = arith.constant 0 : i32
    return %c0_i32, %c0_i32_0 : i32, i32
  }
  func.func @transform_15(%arg0: i32) -> (i32, i32) {
    %c0_i32 = arith.constant 0 : i32
    %c0_i32_0 = arith.constant 0 : i32
    %c0_i32_1 = arith.constant 0 : i32
    return %c0_i32, %c0_i32_0 : i32, i32
  }
  func.func @transform_16(%arg0: i32) -> (i32, i32) {
    %c0_i32 = arith.constant 0 : i32
    %c0_i32_0 = arith.constant 0 : i32
    %c0_i32_1 = arith.constant 0 : i32
    return %c0_i32, %c0_i32_0 : i32, i32
  }
  func.func @transform_17(%arg0: i32) -> (i32, i32) {
    %c0_i32 = arith.constant 0 : i32
    %c0_i32_0 = arith.constant 0 : i32
    %c0_i32_1 = arith.constant 0 : i32
    return %c0_i32, %c0_i32_0 : i32, i32
  }
  func.func @transform_18(%arg0: i32) -> (i32, i32) {
    %c0_i32 = arith.constant 0 : i32
    %c0_i32_0 = arith.constant 0 : i32
    return %arg0, %c0_i32 : i32, i32
  }
}

</mosaic_0001>

<llo_original>
// kernel: naive_dl_forward.1
$region0: #{naive_dl_forward.1}
  #allocation0 [shape = 'u32[]', space=smem, size = 0x4, offset = 0x4, fixed_abs, tag = 'smem constant byte address 0x4 - core index']
  #allocation1 [shape = 'u32[144,128]{1,0:T(1,128)}', space=vmem, size = 0x12000, scoped, tag = 'internal scratch']
  %s0 = inlined_call_operand.vmem [shape: f32[8,128], index: 0, kind: input, shape index: {}]
  %s1 = inlined_call_operand.vmem [shape: f32[8,64], index: 1, kind: input, shape index: {}]
  %s2 = inlined_call_operand.vmem [shape: f32[8,64], index: 2, kind: input, shape index: {}]
  %s3 = inlined_call_operand.vmem [shape: f32[128,256], index: 3, kind: input, shape index: {}]
  %s4 = inlined_call_operand.vmem [shape: f32[1,256], index: 4, kind: input, shape index: {}]
  %s5 = inlined_call_operand.vmem [shape: f32[256,128], index: 5, kind: input, shape index: {}]
  %s6 = inlined_call_operand.vmem [shape: f32[1,128], index: 6, kind: input, shape index: {}]
  %s7 = inlined_call_operand.vmem [shape: f32[128,64], index: 7, kind: input, shape index: {}]
  %s8 = inlined_call_operand.vmem [shape: f32[1,64], index: 8, kind: input, shape index: {}]
  %s9 = inlined_call_operand.vmem [shape: f32[64,64], index: 9, kind: input, shape index: {}]
  %s10 = inlined_call_operand.vmem [shape: f32[1,64], index: 10, kind: input, shape index: {}]
  %s11 = inlined_call_operand.vmem [shape: f32[64,64], index: 11, kind: input, shape index: {}]
  %s12 = inlined_call_operand.vmem [shape: f32[64,64], index: 12, kind: input, shape index: {}]
  %s13 = inlined_call_operand.vmem [shape: f32[1,64], index: 13, kind: input, shape index: {}]
  %s14 = inlined_call_operand.vmem [shape: f32[64,64], index: 14, kind: input, shape index: {}]
  %s15 = inlined_call_operand.vmem [shape: f32[64,64], index: 15, kind: input, shape index: {}]
  %s16 = inlined_call_operand.vmem [shape: f32[1,64], index: 16, kind: input, shape index: {}]
  %s17 = inlined_call_operand.vmem [shape: f32[64,64], index: 17, kind: input, shape index: {}]
  %s18 = inlined_call_operand.vmem [shape: f32[8,256], index: 18, kind: output, shape index: {}]
  %s19 = sld [smem:[#allocation0]]
  $region82: #{naive_dl_forward.1} parent=0
    _
  %s21 = ssub.s32 1, %s19
  %s22 = scalar_select 0, %s21, %s19
  // Predicated region
  $region2: #{naive_dl_forward.1} parent=0 // pred_check
    _
  $region3: #{naive_dl_forward.1} parent=0 // pred_check_branch
    %24 = sbr.rel (0) target = $region5
  $region4: #{naive_dl_forward.1} parent=0 // pred_region
    _
  $region5: #{naive_dl_forward.1} parent=0 // pred_fallthru
    _
  // Predicated region
  $region6: #{naive_dl_forward.1} parent=0 // pred_check
    _
  $region7: #{naive_dl_forward.1} parent=0 // pred_check_branch
    %26 = sbr.rel (0) target = $region9
  $region8: #{naive_dl_forward.1} parent=0 // pred_region
    _
  $region9: #{naive_dl_forward.1} parent=0 // pred_fallthru
    _
  // Predicated region
  $region10: #{naive_dl_forward.1} parent=0 // pred_check
    _
  $region11: #{naive_dl_forward.1} parent=0 // pred_check_branch
    %28 = sbr.rel (0) target = $region13
  $region12: #{naive_dl_forward.1} parent=0 // pred_region
    _
  $region13: #{naive_dl_forward.1} parent=0 // pred_fallthru
    _
  // Predicated region
  $region14: #{naive_dl_forward.1} parent=0 // pred_check
    _
  $region15: #{naive_dl_forward.1} parent=0 // pred_check_branch
    %30 = sbr.rel (0) target = $region17
  $region16: #{naive_dl_forward.1} parent=0 // pred_region
    _
  $region17: #{naive_dl_forward.1} parent=0 // pred_fallthru
    _
  // Predicated region
  $region18: #{naive_dl_forward.1} parent=0 // pred_check
    _
  $region19: #{naive_dl_forward.1} parent=0 // pred_check_branch
    %32 = sbr.rel (0) target = $region21
  $region20: #{naive_dl_forward.1} parent=0 // pred_region
    _
  $region21: #{naive_dl_forward.1} parent=0 // pred_fallthru
    _
  // Predicated region
  $region22: #{naive_dl_forward.1} parent=0 // pred_check
    _
  $region23: #{naive_dl_forward.1} parent=0 // pred_check_branch
    %34 = sbr.rel (0) target = $region25
  $region24: #{naive_dl_forward.1} parent=0 // pred_region
    _
  $region25: #{naive_dl_forward.1} parent=0 // pred_fallthru
    _
  // Predicated region
  $region26: #{naive_dl_forward.1} parent=0 // pred_check
    _
  $region27: #{naive_dl_forward.1} parent=0 // pred_check_branch
    %36 = sbr.rel (0) target = $region29
  $region28: #{naive_dl_forward.1} parent=0 // pred_region
    _
  $region29: #{naive_dl_forward.1} parent=0 // pred_fallthru
    _
  // Predicated region
  $region30: #{naive_dl_forward.1} parent=0 // pred_check
    _
  $region31: #{naive_dl_forward.1} parent=0 // pred_check_branch
    %38 = sbr.rel (0) target = $region33
  $region32: #{naive_dl_forward.1} parent=0 // pred_region
    _
  $region33: #{naive_dl_forward.1} parent=0 // pred_fallthru
    _
  // Predicated region
  $region34: #{naive_dl_forward.1} parent=0 // pred_check
    _
  $region35: #{naive_dl_forward.1} parent=0 // pred_check_branch
    %40 = sbr.rel (0) target = $region37
  $region36: #{naive_dl_forward.1} parent=0 // pred_region
    _
  $region37: #{naive_dl_forward.1} parent=0 // pred_fallthru
    _
  // Predicated region
  $region38: #{naive_dl_forward.1} parent=0 // pred_check
    _
  $region39: #{naive_dl_forward.1} parent=0 // pred_check_branch
    %42 = sbr.rel (0) target = $region41
  $region40: #{naive_dl_forward.1} parent=0 // pred_region
    _
  $region41: #{naive_dl_forward.1} parent=0 // pred_fallthru
    _
  // Predicated region
  $region42: #{naive_dl_forward.1} parent=0 // pred_check
    _
  $region43: #{naive_dl_forward.1} parent=0 // pred_check_branch
    %44 = sbr.rel (0) target = $region45
  $region44: #{naive_dl_forward.1} parent=0 // pred_region
    _
  $region45: #{naive_dl_forward.1} parent=0 // pred_fallthru
    _
  // Predicated region
  $region46: #{naive_dl_forward.1} parent=0 // pred_check
    _
  $region47: #{naive_dl_forward.1} parent=0 // pred_check_branch
    %46 = sbr.rel (0) target = $region49
  $region48: #{naive_dl_forward.1} parent=0 // pred_region
    _
  $region49: #{naive_dl_forward.1} parent=0 // pred_fallthru
    _
  // Predicated region
  $region50: #{naive_dl_forward.1} parent=0 // pred_check
    _
  $region51: #{naive_dl_forward.1} parent=0 // pred_check_branch
    %48 = sbr.rel (0) target = $region53
  $region52: #{naive_dl_forward.1} parent=0 // pred_region
    _
  $region53: #{naive_dl_forward.1} parent=0 // pred_fallthru
    _
  // Predicated region
  $region54: #{naive_dl_forward.1} parent=0 // pred_check
    _
  $region55: #{naive_dl_forward.1} parent=0 // pred_check_branch
    %50 = sbr.rel (0) target = $region57
  $region56: #{naive_dl_forward.1} parent=0 // pred_region
    _
  $region57: #{naive_dl_forward.1} parent=0 // pred_fallthru
    _
  // Predicated region
  $region58: #{naive_dl_forward.1} parent=0 // pred_check
    _
  $region59: #{naive_dl_forward.1} parent=0 // pred_check_branch
    %52 = sbr.rel (0) target = $region61
  $region60: #{naive_dl_forward.1} parent=0 // pred_region
    _
  $region61: #{naive_dl_forward.1} parent=0 // pred_fallthru
    _
  // Predicated region
  $region62: #{naive_dl_forward.1} parent=0 // pred_check
    _
  $region63: #{naive_dl_forward.1} parent=0 // pred_check_branch
    %54 = sbr.rel (0) target = $region65
  $region64: #{naive_dl_forward.1} parent=0 // pred_region
    _
  $region65: #{naive_dl_forward.1} parent=0 // pred_fallthru
    _
  // Predicated region
  $region66: #{naive_dl_forward.1} parent=0 // pred_check
    _
  $region67: #{naive_dl_forward.1} parent=0 // pred_check_branch
    %56 = sbr.rel (0) target = $region69
  $region68: #{naive_dl_forward.1} parent=0 // pred_region
    _
  $region69: #{naive_dl_forward.1} parent=0 // pred_fallthru
    _
  // Predicated region
  $region70: #{naive_dl_forward.1} parent=0 // pred_check
    _
  $region71: #{naive_dl_forward.1} parent=0 // pred_check_branch
    %58 = sbr.rel (0) target = $region73
  $region72: #{naive_dl_forward.1} parent=0 // pred_region
    _
  $region73: #{naive_dl_forward.1} parent=0 // pred_fallthru
    _
  %v59 = vld [vmem:[%s0] sm:$0xff]
  %v60 = vld [vmem:[%s3] sm:$0xff]
  %v61 = vld [vmem:[%s3 + $0x8] sm:$0xff]
  %v62 = vld [vmem:[%s3 + $0x10] sm:$0xff]
  %v63 = vld [vmem:[%s3 + $0x18] sm:$0xff]
  %v64 = vld [vmem:[%s3 + $0x20] sm:$0xff]
  %v65 = vld [vmem:[%s3 + $0x28] sm:$0xff]
  %v66 = vld [vmem:[%s3 + $0x30] sm:$0xff]
  %v67 = vld [vmem:[%s3 + $0x38] sm:$0xff]
  %v68 = vld [vmem:[%s3 + $0x40] sm:$0xff]
  %v69 = vld [vmem:[%s3 + $0x48] sm:$0xff]
  %v70 = vld [vmem:[%s3 + $0x50] sm:$0xff]
  %v71 = vld [vmem:[%s3 + $0x58] sm:$0xff]
  %v72 = vld [vmem:[%s3 + $0x60] sm:$0xff]
  %v73 = vld [vmem:[%s3 + $0x68] sm:$0xff]
  %v74 = vld [vmem:[%s3 + $0x70] sm:$0xff]
  %v75 = vld [vmem:[%s3 + $0x78] sm:$0xff]
  %v76 = vld [vmem:[%s3 + $0x80] sm:$0xff]
  %v77 = vld [vmem:[%s3 + $0x88] sm:$0xff]
  %v78 = vld [vmem:[%s3 + $0x90] sm:$0xff]
  %v79 = vld [vmem:[%s3 + $0x98] sm:$0xff]
  %v80 = vld [vmem:[%s3 + $0xa0] sm:$0xff]
  %v81 = vld [vmem:[%s3 + $0xa8] sm:$0xff]
  %v82 = vld [vmem:[%s3 + $0xb0] sm:$0xff]
  %v83 = vld [vmem:[%s3 + $0xb8] sm:$0xff]
  %v84 = vld [vmem:[%s3 + $0xc0] sm:$0xff]
  %v85 = vld [vmem:[%s3 + $0xc8] sm:$0xff]
  %v86 = vld [vmem:[%s3 + $0xd0] sm:$0xff]
  %v87 = vld [vmem:[%s3 + $0xd8] sm:$0xff]
  %v88 = vld [vmem:[%s3 + $0xe0] sm:$0xff]
  %v89 = vld [vmem:[%s3 + $0xe8] sm:$0xff]
  %v90 = vld [vmem:[%s3 + $0xf0] sm:$0xff]
  %v91 = vld [vmem:[%s3 + $0xf8] sm:$0xff]
  %v92 = vld [vmem:[%s4] sm:$0x3]
  %v94 = vlaneseq
  %v95 = vshrl.u32 %v94, 7
  %v96 = vsub.s32 0, %v95
  %v97 = vrot.slane %v92, %v96
  %v98 = vlaneseq
  %v99 = vshrl.u32 %v98, 7
  %v100 = vsub.s32 1, %v99
  %v101 = vrot.slane %v92, %v100
  %104 = vmatprep.subr.mxu0 %v61
  %105 = vmatpush1.msra.mxu0 %v60
  %106 = vmatprep.subr.mxu0 %v63
  %107 = vmatpush1.msra.mxu0 %v62
  %108 = vmatprep.subr.mxu0 %v65
  %109 = vmatpush1.msra.mxu0 %v64
  %110 = vmatprep.subr.mxu0 %v67
  %111 = vmatpush1.msra.mxu0 %v66
  %112 = vmatprep.subr.mxu0 %v69
  %113 = vmatpush1.msra.mxu0 %v68
  %114 = vmatprep.subr.mxu0 %v71
  %115 = vmatpush1.msra.mxu0 %v70
  %116 = vmatprep.subr.mxu0 %v73
  %117 = vmatpush1.msra.mxu0 %v72
  %118 = vmatprep.subr.mxu0 %v75
  %119 = vmatpush1.msra.mxu0 %v74
  %120 = vmatprep.subr.mxu0 %v77
  %121 = vmatpush1.msra.mxu0 %v76
  %122 = vmatprep.subr.mxu0 %v79
  %123 = vmatpush1.msra.mxu0 %v78
  %124 = vmatprep.subr.mxu0 %v81
  %125 = vmatpush1.msra.mxu0 %v80
  %126 = vmatprep.subr.mxu0 %v83
  %127 = vmatpush1.msra.mxu0 %v82
  %128 = vmatprep.subr.mxu0 %v85
  %129 = vmatpush1.msra.mxu0 %v84
  %130 = vmatprep.subr.mxu0 %v87
  %131 = vmatpush1.msra.mxu0 %v86
  %132 = vmatprep.subr.mxu0 %v89
  %133 = vmatpush1.msra.mxu0 %v88
  %134 = vmatprep.subr.mxu0 %v91
  %135 = vmatpush1.msra.mxu0 %v90
  %136 = vmatprep.subr.mxu0 0.0
  %137 = vmatpush1.msra.mxu0 0.0
  %138 = vmatprep.subr.mxu0 0.0
  %139 = vmatpush1.msra.mxu0 0.0
  %140 = vmatprep.subr.mxu0 0.0
  %141 = vmatpush1.msra.mxu0 0.0
  %142 = vmatprep.subr.mxu0 0.0
  %143 = vmatpush1.msra.mxu0 0.0
  %144 = vmatprep.subr.mxu0 0.0
  %145 = vmatpush1.msra.mxu0 0.0
  %146 = vmatprep.subr.mxu0 0.0
  %147 = vmatpush1.msra.mxu0 0.0
  %148 = vmatprep.subr.mxu0 0.0
  %149 = vmatpush1.msra.mxu0 0.0
  %150 = vmatprep.subr.mxu0 0.0
  %151 = vmatpush1.msra.mxu0 0.0
  %152 = vmatprep.subr.mxu0 0.0
  %153 = vmatpush1.msra.mxu0 0.0
  %154 = vmatprep.subr.mxu0 0.0
  %155 = vmatpush1.msra.mxu0 0.0
  %156 = vmatprep.subr.mxu0 0.0
  %157 = vmatpush1.msra.mxu0 0.0
  %158 = vmatprep.subr.mxu0 0.0
  %159 = vmatpush1.msra.mxu0 0.0
  %160 = vmatprep.subr.mxu0 0.0
  %161 = vmatpush1.msra.mxu0 0.0
  %162 = vmatprep.subr.mxu0 0.0
  %163 = vmatpush1.msra.mxu0 0.0
  %164 = vmatprep.subr.mxu0 0.0
  %165 = vmatpush1.msra.mxu0 0.0
  %166 = vmatprep.subr.mxu0 0.0
  %167 = vmatpush1.msra.mxu0 0.0
  %168 = vmatprep.mubr.f32.mxu0 0.0
  %169 = vmatmul.mubr.f32.gmra.mrb[0].mxu0 %v59
  %v170 = vpop.f32.mrb[0].mxu0
  %v171 = vadd.f32 %v97, %v170
  %v172 = vpop.f32.mrb[0].mxu0
  %v173 = vadd.f32 %v101, %v172
  %174 = vdwg.mxu0
  %vm175 = vcmp.gt.f32.partialorder %v171, 0.0
  %vm176 = vcmp.gt.f32.partialorder %v173, 0.0
  %v177 = vmul.f32 %v171, 0.01
  %v178 = vmul.f32 %v173, 0.01
  %v179 = vsel %vm175, %v171, %v177
  %v180 = vsel %vm176, %v173, %v178
  %v181 = vld [vmem:[%s5] sm:$0xff]
  %v182 = vld [vmem:[%s5 + $0x8] sm:$0xff]
  %v183 = vld [vmem:[%s5 + $0x10] sm:$0xff]
  %v184 = vld [vmem:[%s5 + $0x18] sm:$0xff]
  %v185 = vld [vmem:[%s5 + $0x20] sm:$0xff]
  %v186 = vld [vmem:[%s5 + $0x28] sm:$0xff]
  %v187 = vld [vmem:[%s5 + $0x30] sm:$0xff]
  %v188 = vld [vmem:[%s5 + $0x38] sm:$0xff]
  %v189 = vld [vmem:[%s5 + $0x40] sm:$0xff]
  %v190 = vld [vmem:[%s5 + $0x48] sm:$0xff]
  %v191 = vld [vmem:[%s5 + $0x50] sm:$0xff]
  %v192 = vld [vmem:[%s5 + $0x58] sm:$0xff]
  %v193 = vld [vmem:[%s5 + $0x60] sm:$0xff]
  %v194 = vld [vmem:[%s5 + $0x68] sm:$0xff]
  %v195 = vld [vmem:[%s5 + $0x70] sm:$0xff]
  %v196 = vld [vmem:[%s5 + $0x78] sm:$0xff]
  %v197 = vld [vmem:[%s5 + $0x80] sm:$0xff]
  %v198 = vld [vmem:[%s5 + $0x88] sm:$0xff]
  %v199 = vld [vmem:[%s5 + $0x90] sm:$0xff]
  %v200 = vld [vmem:[%s5 + $0x98] sm:$0xff]
  %v201 = vld [vmem:[%s5 + $0xa0] sm:$0xff]
  %v202 = vld [vmem:[%s5 + $0xa8] sm:$0xff]
  %v203 = vld [vmem:[%s5 + $0xb0] sm:$0xff]
  %v204 = vld [vmem:[%s5 + $0xb8] sm:$0xff]
  %v205 = vld [vmem:[%s5 + $0xc0] sm:$0xff]
  %v206 = vld [vmem:[%s5 + $0xc8] sm:$0xff]
  %v207 = vld [vmem:[%s5 + $0xd0] sm:$0xff]
  %v208 = vld [vmem:[%s5 + $0xd8] sm:$0xff]
  %v209 = vld [vmem:[%s5 + $0xe0] sm:$0xff]
  %v210 = vld [vmem:[%s5 + $0xe8] sm:$0xff]
  %v211 = vld [vmem:[%s5 + $0xf0] sm:$0xff]
  %v212 = vld [vmem:[%s5 + $0xf8] sm:$0xff]
  %v213 = vld [vmem:[%s6] sm:$0x1]
  %v215 = vlaneseq
  %v216 = vshrl.u32 %v215, 7
  %v217 = vsub.s32 0, %v216
  %v218 = vrot.slane %v213, %v217
  %220 = vmatprep.subr.mxu0 0.0
  %221 = vmatpush1.msra.mxu0 %v181
  %222 = vmatprep.subr.mxu0 0.0
  %223 = vmatpush1.msra.mxu0 %v182
  %224 = vmatprep.subr.mxu0 0.0
  %225 = vmatpush1.msra.mxu0 %v183
  %226 = vmatprep.subr.mxu0 0.0
  %227 = vmatpush1.msra.mxu0 %v184
  %228 = vmatprep.subr.mxu0 0.0
  %229 = vmatpush1.msra.mxu0 %v185
  %230 = vmatprep.subr.mxu0 0.0
  %231 = vmatpush1.msra.mxu0 %v186
  %232 = vmatprep.subr.mxu0 0.0
  %233 = vmatpush1.msra.mxu0 %v187
  %234 = vmatprep.subr.mxu0 0.0
  %235 = vmatpush1.msra.mxu0 %v188
  %236 = vmatprep.subr.mxu0 0.0
  %237 = vmatpush1.msra.mxu0 %v189
  %238 = vmatprep.subr.mxu0 0.0
  %239 = vmatpush1.msra.mxu0 %v190
  %240 = vmatprep.subr.mxu0 0.0
  %241 = vmatpush1.msra.mxu0 %v191
  %242 = vmatprep.subr.mxu0 0.0
  %243 = vmatpush1.msra.mxu0 %v192
  %244 = vmatprep.subr.mxu0 0.0
  %245 = vmatpush1.msra.mxu0 %v193
  %246 = vmatprep.subr.mxu0 0.0
  %247 = vmatpush1.msra.mxu0 %v194
  %248 = vmatprep.subr.mxu0 0.0
  %249 = vmatpush1.msra.mxu0 %v195
  %250 = vmatprep.subr.mxu0 0.0
  %251 = vmatpush1.msra.mxu0 %v196
  %252 = vmatprep.subr.mxu0 0.0
  %253 = vmatpush1.msra.mxu0 %v197
  %254 = vmatprep.subr.mxu0 0.0
  %255 = vmatpush1.msra.mxu0 %v198
  %256 = vmatprep.subr.mxu0 0.0
  %257 = vmatpush1.msra.mxu0 %v199
  %258 = vmatprep.subr.mxu0 0.0
  %259 = vmatpush1.msra.mxu0 %v200
  %260 = vmatprep.subr.mxu0 0.0
  %261 = vmatpush1.msra.mxu0 %v201
  %262 = vmatprep.subr.mxu0 0.0
  %263 = vmatpush1.msra.mxu0 %v202
  %264 = vmatprep.subr.mxu0 0.0
  %265 = vmatpush1.msra.mxu0 %v203
  %266 = vmatprep.subr.mxu0 0.0
  %267 = vmatpush1.msra.mxu0 %v204
  %268 = vmatprep.subr.mxu0 0.0
  %269 = vmatpush1.msra.mxu0 %v205
  %270 = vmatprep.subr.mxu0 0.0
  %271 = vmatpush1.msra.mxu0 %v206
  %272 = vmatprep.subr.mxu0 0.0
  %273 = vmatpush1.msra.mxu0 %v207
  %274 = vmatprep.subr.mxu0 0.0
  %275 = vmatpush1.msra.mxu0 %v208
  %276 = vmatprep.subr.mxu0 0.0
  %277 = vmatpush1.msra.mxu0 %v209
  %278 = vmatprep.subr.mxu0 0.0
  %279 = vmatpush1.msra.mxu0 %v210
  %280 = vmatprep.subr.mxu0 0.0
  %281 = vmatpush1.msra.mxu0 %v211
  %282 = vmatprep.subr.mxu0 0.0
  %283 = vmatpush1.msra.mxu0 %v212
  %284 = vmatprep.mubr.f32.mxu0 %v180
  %285 = vmatmul.mubr.f32.gmra.mrb[0].mxu0 %v179
  %v286 = vpop.f32.mrb[0].mxu0
  %v287 = vadd.f32 %v218, %v286
  %v288 = vpop.f32.mrb[0].mxu0
  %289 = vdwg.mxu0
  %vm290 = vcmp.gt.f32.partialorder %v287, 0.0
  %v291 = vmul.f32 %v287, 0.01
  %v292 = vsel %vm290, %v287, %v291
  %v293 = vld [vmem:[%s7] sm:$0xff]
  %v294 = vld [vmem:[%s7 + $0x8] sm:$0xff]
  %v295 = vld [vmem:[%s7 + $0x10] sm:$0xff]
  %v296 = vld [vmem:[%s7 + $0x18] sm:$0xff]
  %v297 = vld [vmem:[%s7 + $0x20] sm:$0xff]
  %v298 = vld [vmem:[%s7 + $0x28] sm:$0xff]
  %v299 = vld [vmem:[%s7 + $0x30] sm:$0xff]
  %v300 = vld [vmem:[%s7 + $0x38] sm:$0xff]
  %v301 = vld [vmem:[%s7 + $0x40] sm:$0xff]
  %v302 = vld [vmem:[%s7 + $0x48] sm:$0xff]
  %v303 = vld [vmem:[%s7 + $0x50] sm:$0xff]
  %v304 = vld [vmem:[%s7 + $0x58] sm:$0xff]
  %v305 = vld [vmem:[%s7 + $0x60] sm:$0xff]
  %v306 = vld [vmem:[%s7 + $0x68] sm:$0xff]
  %v307 = vld [vmem:[%s7 + $0x70] sm:$0xff]
  %v308 = vld [vmem:[%s7 + $0x78] sm:$0xff]
  %v309 = vld [vmem:[%s8] sm:$0x1]
  %v311 = vlaneseq
  %v312 = vshrl.u32 %v311, 7
  %v313 = vsub.s32 0, %v312
  %v314 = vrot.slane %v309, %v313
  %316 = vmatprep.subr.mxu0 0.0
  %317 = vmatpush1.msra.mxu0 %v293
  %318 = vmatprep.subr.mxu0 0.0
  %319 = vmatpush1.msra.mxu0 %v294
  %320 = vmatprep.subr.mxu0 0.0
  %321 = vmatpush1.msra.mxu0 %v295
  %322 = vmatprep.subr.mxu0 0.0
  %323 = vmatpush1.msra.mxu0 %v296
  %324 = vmatprep.subr.mxu0 0.0
  %325 = vmatpush1.msra.mxu0 %v297
  %326 = vmatprep.subr.mxu0 0.0
  %327 = vmatpush1.msra.mxu0 %v298
  %328 = vmatprep.subr.mxu0 0.0
  %329 = vmatpush1.msra.mxu0 %v299
  %330 = vmatprep.subr.mxu0 0.0
  %331 = vmatpush1.msra.mxu0 %v300
  %332 = vmatprep.subr.mxu0 0.0
  %333 = vmatpush1.msra.mxu0 %v301
  %334 = vmatprep.subr.mxu0 0.0
  %335 = vmatpush1.msra.mxu0 %v302
  %336 = vmatprep.subr.mxu0 0.0
  %337 = vmatpush1.msra.mxu0 %v303
  %338 = vmatprep.subr.mxu0 0.0
  %339 = vmatpush1.msra.mxu0 %v304
  %340 = vmatprep.subr.mxu0 0.0
  %341 = vmatpush1.msra.mxu0 %v305
  %342 = vmatprep.subr.mxu0 0.0
  %343 = vmatpush1.msra.mxu0 %v306
  %344 = vmatprep.subr.mxu0 0.0
  %345 = vmatpush1.msra.mxu0 %v307
  %346 = vmatprep.subr.mxu0 0.0
  %347 = vmatpush1.msra.mxu0 %v308
  %348 = vmatprep.subr.mxu0 0.0
  %349 = vmatpush1.msra.mxu0 0.0
  %350 = vmatprep.subr.mxu0 0.0
  %351 = vmatpush1.msra.mxu0 0.0
  %352 = vmatprep.subr.mxu0 0.0
  %353 = vmatpush1.msra.mxu0 0.0
  %354 = vmatprep.subr.mxu0 0.0
  %355 = vmatpush1.msra.mxu0 0.0
  %356 = vmatprep.subr.mxu0 0.0
  %357 = vmatpush1.msra.mxu0 0.0
  %358 = vmatprep.subr.mxu0 0.0
  %359 = vmatpush1.msra.mxu0 0.0
  %360 = vmatprep.subr.mxu0 0.0
  %361 = vmatpush1.msra.mxu0 0.0
  %362 = vmatprep.subr.mxu0 0.0
  %363 = vmatpush1.msra.mxu0 0.0
  %364 = vmatprep.subr.mxu0 0.0
  %365 = vmatpush1.msra.mxu0 0.0
  %366 = vmatprep.subr.mxu0 0.0
  %367 = vmatpush1.msra.mxu0 0.0
  %368 = vmatprep.subr.mxu0 0.0
  %369 = vmatpush1.msra.mxu0 0.0
  %370 = vmatprep.subr.mxu0 0.0
  %371 = vmatpush1.msra.mxu0 0.0
  %372 = vmatprep.subr.mxu0 0.0
  %373 = vmatpush1.msra.mxu0 0.0
  %374 = vmatprep.subr.mxu0 0.0
  %375 = vmatpush1.msra.mxu0 0.0
  %376 = vmatprep.subr.mxu0 0.0
  %377 = vmatpush1.msra.mxu0 0.0
  %378 = vmatprep.subr.mxu0 0.0
  %379 = vmatpush1.msra.mxu0 0.0
  %380 = vmatprep.mubr.f32.mxu0 0.0
  %381 = vmatmul.mubr.f32.gmra.mrb[0].mxu0 %v292
  %v382 = vpop.f32.mrb[0].mxu0
  %v383 = vadd.f32 %v314, %v382
  %v384 = vpop.f32.mrb[0].mxu0
  %385 = vdwg.mxu0
  %vm386 = vcmp.gt.f32.partialorder %v383, 0.0
  %v387 = vmul.f32 %v383, 0.01
  %v388 = vsel %vm386, %v383, %v387
  %v389 = vld [vmem:[%s1] sm:$0xff]
  %v390 = vld [vmem:[%s9] sm:$0xff]
  %v391 = vld [vmem:[%s9 + $0x8] sm:$0xff]
  %v392 = vld [vmem:[%s9 + $0x10] sm:$0xff]
  %v393 = vld [vmem:[%s9 + $0x18] sm:$0xff]
  %v394 = vld [vmem:[%s9 + $0x20] sm:$0xff]
  %v395 = vld [vmem:[%s9 + $0x28] sm:$0xff]
  %v396 = vld [vmem:[%s9 + $0x30] sm:$0xff]
  %v397 = vld [vmem:[%s9 + $0x38] sm:$0xff]
  %v398 = vld [vmem:[%s10] sm:$0x1]
  %v400 = vlaneseq
  %v401 = vshrl.u32 %v400, 7
  %v402 = vsub.s32 0, %v401
  %v403 = vrot.slane %v398, %v402
  %vm405 = vcmask 523264
  %v407 = vsel %vm405, %v389, 0
  %409 = vmatprep.subr.mxu0 0.0
  %410 = vmatpush1.msra.mxu0 %v390
  %411 = vmatprep.subr.mxu0 0.0
  %412 = vmatpush1.msra.mxu0 %v391
  %413 = vmatprep.subr.mxu0 0.0
  %414 = vmatpush1.msra.mxu0 %v392
  %415 = vmatprep.subr.mxu0 0.0
  %416 = vmatpush1.msra.mxu0 %v393
  %417 = vmatprep.subr.mxu0 0.0
  %418 = vmatpush1.msra.mxu0 %v394
  %419 = vmatprep.subr.mxu0 0.0
  %420 = vmatpush1.msra.mxu0 %v395
  %421 = vmatprep.subr.mxu0 0.0
  %422 = vmatpush1.msra.mxu0 %v396
  %423 = vmatprep.subr.mxu0 0.0
  %424 = vmatpush1.msra.mxu0 %v397
  %425 = vmatprep.subr.mxu0 0.0
  %426 = vmatpush1.msra.mxu0 0.0
  %427 = vmatprep.subr.mxu0 0.0
  %428 = vmatpush1.msra.mxu0 0.0
  %429 = vmatprep.subr.mxu0 0.0
  %430 = vmatpush1.msra.mxu0 0.0
  %431 = vmatprep.subr.mxu0 0.0
  %432 = vmatpush1.msra.mxu0 0.0
  %433 = vmatprep.subr.mxu0 0.0
  %434 = vmatpush1.msra.mxu0 0.0
  %435 = vmatprep.subr.mxu0 0.0
  %436 = vmatpush1.msra.mxu0 0.0
  %437 = vmatprep.subr.mxu0 0.0
  %438 = vmatpush1.msra.mxu0 0.0
  %439 = vmatprep.subr.mxu0 0.0
  %440 = vmatpush1.msra.mxu0 0.0
  %441 = vmatprep.subr.mxu0 0.0
  %442 = vmatpush1.msra.mxu0 0.0
  %443 = vmatprep.subr.mxu0 0.0
  %444 = vmatpush1.msra.mxu0 0.0
  %445 = vmatprep.subr.mxu0 0.0
  %446 = vmatpush1.msra.mxu0 0.0
  %447 = vmatprep.subr.mxu0 0.0
  %448 = vmatpush1.msra.mxu0 0.0
  %449 = vmatprep.subr.mxu0 0.0
  %450 = vmatpush1.msra.mxu0 0.0
  %451 = vmatprep.subr.mxu0 0.0
  %452 = vmatpush1.msra.mxu0 0.0
  %453 = vmatprep.subr.mxu0 0.0
  %454 = vmatpush1.msra.mxu0 0.0
  %455 = vmatprep.subr.mxu0 0.0
  %456 = vmatpush1.msra.mxu0 0.0
  %457 = vmatprep.subr.mxu0 0.0
  %458 = vmatpush1.msra.mxu0 0.0
  %459 = vmatprep.subr.mxu0 0.0
  %460 = vmatpush1.msra.mxu0 0.0
  %461 = vmatprep.subr.mxu0 0.0
  %462 = vmatpush1.msra.mxu0 0.0
  %463 = vmatprep.subr.mxu0 0.0
  %464 = vmatpush1.msra.mxu0 0.0
  %465 = vmatprep.subr.mxu0 0.0
  %466 = vmatpush1.msra.mxu0 0.0
  %467 = vmatprep.subr.mxu0 0.0
  %468 = vmatpush1.msra.mxu0 0.0
  %469 = vmatprep.subr.mxu0 0.0
  %470 = vmatpush1.msra.mxu0 0.0
  %471 = vmatprep.subr.mxu0 0.0
  %472 = vmatpush1.msra.mxu0 0.0
  %473 = vmatprep.mubr.f32.mxu0 0.0
  %474 = vmatmul.mubr.f32.gmra.mrb[0].mxu0 %v407
  %v475 = vpop.f32.mrb[0].mxu0
  %v476 = vadd.f32 %v403, %v475
  %v477 = vpop.f32.mrb[0].mxu0
  %478 = vdwg.mxu0
  %vm479 = vcmp.gt.f32.partialorder %v476, 0.0
  %v480 = vmul.f32 %v476, 0.01
  %v481 = vsel %vm479, %v476, %v480
  %v482 = vld [vmem:[%s11] sm:$0xff]
  %v483 = vld [vmem:[%s11 + $0x8] sm:$0xff]
  %v484 = vld [vmem:[%s11 + $0x10] sm:$0xff]
  %v485 = vld [vmem:[%s11 + $0x18] sm:$0xff]
  %v486 = vld [vmem:[%s11 + $0x20] sm:$0xff]
  %v487 = vld [vmem:[%s11 + $0x28] sm:$0xff]
  %v488 = vld [vmem:[%s11 + $0x30] sm:$0xff]
  %v489 = vld [vmem:[%s11 + $0x38] sm:$0xff]
  %v490 = vld [vmem:[%s2] sm:$0xff]
  %v491 = vld [vmem:[%s12] sm:$0xff]
  %v492 = vld [vmem:[%s12 + $0x8] sm:$0xff]
  %v493 = vld [vmem:[%s12 + $0x10] sm:$0xff]
  %v494 = vld [vmem:[%s12 + $0x18] sm:$0xff]
  %v495 = vld [vmem:[%s12 + $0x20] sm:$0xff]
  %v496 = vld [vmem:[%s12 + $0x28] sm:$0xff]
  %v497 = vld [vmem:[%s12 + $0x30] sm:$0xff]
  %v498 = vld [vmem:[%s12 + $0x38] sm:$0xff]
  %v500 = vsel %vm405, %v490, 0
  %502 = vmatprep.subr.mxu0 0.0
  %503 = vmatpush1.msra.mxu0 %v491
  %504 = vmatprep.subr.mxu0 0.0
  %505 = vmatpush1.msra.mxu0 %v492
  %506 = vmatprep.subr.mxu0 0.0
  %507 = vmatpush1.msra.mxu0 %v493
  %508 = vmatprep.subr.mxu0 0.0
  %509 = vmatpush1.msra.mxu0 %v494
  %510 = vmatprep.subr.mxu0 0.0
  %511 = vmatpush1.msra.mxu0 %v495
  %512 = vmatprep.subr.mxu0 0.0
  %513 = vmatpush1.msra.mxu0 %v496
  %514 = vmatprep.subr.mxu0 0.0
  %515 = vmatpush1.msra.mxu0 %v497
  %516 = vmatprep.subr.mxu0 0.0
  %517 = vmatpush1.msra.mxu0 %v498
  %518 = vmatprep.subr.mxu0 0.0
  %519 = vmatpush1.msra.mxu0 0.0
  %520 = vmatprep.subr.mxu0 0.0
  %521 = vmatpush1.msra.mxu0 0.0
  %522 = vmatprep.subr.mxu0 0.0
  %523 = vmatpush1.msra.mxu0 0.0
  %524 = vmatprep.subr.mxu0 0.0
  %525 = vmatpush1.msra.mxu0 0.0
  %526 = vmatprep.subr.mxu0 0.0
  %527 = vmatpush1.msra.mxu0 0.0
  %528 = vmatprep.subr.mxu0 0.0
  %529 = vmatpush1.msra.mxu0 0.0
  %530 = vmatprep.subr.mxu0 0.0
  %531 = vmatpush1.msra.mxu0 0.0
  %532 = vmatprep.subr.mxu0 0.0
  %533 = vmatpush1.msra.mxu0 0.0
  %534 = vmatprep.subr.mxu0 0.0
  %535 = vmatpush1.msra.mxu0 0.0
  %536 = vmatprep.subr.mxu0 0.0
  %537 = vmatpush1.msra.mxu0 0.0
  %538 = vmatprep.subr.mxu0 0.0
  %539 = vmatpush1.msra.mxu0 0.0
  %540 = vmatprep.subr.mxu0 0.0
  %541 = vmatpush1.msra.mxu0 0.0
  %542 = vmatprep.subr.mxu0 0.0
  %543 = vmatpush1.msra.mxu0 0.0
  %544 = vmatprep.subr.mxu0 0.0
  %545 = vmatpush1.msra.mxu0 0.0
  %546 = vmatprep.subr.mxu0 0.0
  %547 = vmatpush1.msra.mxu0 0.0
  %548 = vmatprep.subr.mxu0 0.0
  %549 = vmatpush1.msra.mxu0 0.0
  %550 = vmatprep.subr.mxu0 0.0
  %551 = vmatpush1.msra.mxu0 0.0
  %552 = vmatprep.subr.mxu0 0.0
  %553 = vmatpush1.msra.mxu0 0.0
  %554 = vmatprep.subr.mxu0 0.0
  %555 = vmatpush1.msra.mxu0 0.0
  %556 = vmatprep.subr.mxu0 0.0
  %557 = vmatpush1.msra.mxu0 0.0
  %558 = vmatprep.subr.mxu0 0.0
  %559 = vmatpush1.msra.mxu0 0.0
  %560 = vmatprep.subr.mxu0 0.0
  %561 = vmatpush1.msra.mxu0 0.0
  %562 = vmatprep.subr.mxu0 0.0
  %563 = vmatpush1.msra.mxu0 0.0
  %564 = vmatprep.subr.mxu0 0.0
  %565 = vmatpush1.msra.mxu0 0.0
  %566 = vmatprep.mubr.f32.mxu0 0.0
  %567 = vmatmul.mubr.f32.gmra.mrb[0].mxu0 %v500
  %v568 = vpop.f32.mrb[0].mxu0
  %v569 = vadd.f32 0.0, %v568
  %v570 = vpop.f32.mrb[0].mxu0
  %571 = vdwg.mxu0
  %v573 = vsel %vm405, %v481, 0
  %575 = vmatprep.subr.mxu0 0.0
  %576 = vmatpush1.msra.mxu0 %v482
  %577 = vmatprep.subr.mxu0 0.0
  %578 = vmatpush1.msra.mxu0 %v483
  %579 = vmatprep.subr.mxu0 0.0
  %580 = vmatpush1.msra.mxu0 %v484
  %581 = vmatprep.subr.mxu0 0.0
  %582 = vmatpush1.msra.mxu0 %v485
  %583 = vmatprep.subr.mxu0 0.0
  %584 = vmatpush1.msra.mxu0 %v486
  %585 = vmatprep.subr.mxu0 0.0
  %586 = vmatpush1.msra.mxu0 %v487
  %587 = vmatprep.subr.mxu0 0.0
  %588 = vmatpush1.msra.mxu0 %v488
  %589 = vmatprep.subr.mxu0 0.0
  %590 = vmatpush1.msra.mxu0 %v489
  %591 = vmatprep.subr.mxu0 0.0
  %592 = vmatpush1.msra.mxu0 0.0
  %593 = vmatprep.subr.mxu0 0.0
  %594 = vmatpush1.msra.mxu0 0.0
  %595 = vmatprep.subr.mxu0 0.0
  %596 = vmatpush1.msra.mxu0 0.0
  %597 = vmatprep.subr.mxu0 0.0
  %598 = vmatpush1.msra.mxu0 0.0
  %599 = vmatprep.subr.mxu0 0.0
  %600 = vmatpush1.msra.mxu0 0.0
  %601 = vmatprep.subr.mxu0 0.0
  %602 = vmatpush1.msra.mxu0 0.0
  %603 = vmatprep.subr.mxu0 0.0
  %604 = vmatpush1.msra.mxu0 0.0
  %605 = vmatprep.subr.mxu0 0.0
  %606 = vmatpush1.msra.mxu0 0.0
  %607 = vmatprep.subr.mxu0 0.0
  %608 = vmatpush1.msra.mxu0 0.0
  %609 = vmatprep.subr.mxu0 0.0
  %610 = vmatpush1.msra.mxu0 0.0
  %611 = vmatprep.subr.mxu0 0.0
  %612 = vmatpush1.msra.mxu0 0.0
  %613 = vmatprep.subr.mxu0 0.0
  %614 = vmatpush1.msra.mxu0 0.0
  %615 = vmatprep.subr.mxu0 0.0
  %616 = vmatpush1.msra.mxu0 0.0
  %617 = vmatprep.subr.mxu0 0.0
  %618 = vmatpush1.msra.mxu0 0.0
  %619 = vmatprep.subr.mxu0 0.0
  %620 = vmatpush1.msra.mxu0 0.0
  %621 = vmatprep.subr.mxu0 0.0
  %622 = vmatpush1.msra.mxu0 0.0
  %623 = vmatprep.subr.mxu0 0.0
  %624 = vmatpush1.msra.mxu0 0.0
  %625 = vmatprep.subr.mxu0 0.0
  %626 = vmatpush1.msra.mxu0 0.0
  %627 = vmatprep.subr.mxu0 0.0
  %628 = vmatpush1.msra.mxu0 0.0
  %629 = vmatprep.subr.mxu0 0.0
  %630 = vmatpush1.msra.mxu0 0.0
  %631 = vmatprep.subr.mxu0 0.0
  %632 = vmatpush1.msra.mxu0 0.0
  %633 = vmatprep.subr.mxu0 0.0
  %634 = vmatpush1.msra.mxu0 0.0
  %635 = vmatprep.subr.mxu0 0.0
  %636 = vmatpush1.msra.mxu0 0.0
  %637 = vmatprep.subr.mxu0 0.0
  %638 = vmatpush1.msra.mxu0 0.0
  %639 = vmatprep.mubr.f32.mxu0 0.0
  %640 = vmatmul.mubr.f32.gmra.mrb[0].mxu0 %v573
  %v641 = vpop.f32.mrb[0].mxu0
  %v642 = vadd.f32 %v569, %v641
  %v643 = vpop.f32.mrb[0].mxu0
  %644 = vdwg.mxu0
  %v645 = vld [vmem:[%s13] sm:$0x1]
  %v647 = vlaneseq
  %v648 = vshrl.u32 %v647, 7
  %v649 = vsub.s32 0, %v648
  %v650 = vrot.slane %v645, %v649
  %v652 = vadd.f32 %v642, %v650
  %vm653 = vcmp.gt.f32.partialorder %v652, 0.0
  %v654 = vmul.f32 %v652, 0.01
  %v655 = vsel %vm653, %v652, %v654
  %v656 = vld [vmem:[%s14] sm:$0xff]
  %v657 = vld [vmem:[%s14 + $0x8] sm:$0xff]
  %v658 = vld [vmem:[%s14 + $0x10] sm:$0xff]
  %v659 = vld [vmem:[%s14 + $0x18] sm:$0xff]
  %v660 = vld [vmem:[%s14 + $0x20] sm:$0xff]
  %v661 = vld [vmem:[%s14 + $0x28] sm:$0xff]
  %v662 = vld [vmem:[%s14 + $0x30] sm:$0xff]
  %v663 = vld [vmem:[%s14 + $0x38] sm:$0xff]
  %v664 = vld [vmem:[%s15] sm:$0xff]
  %v665 = vld [vmem:[%s15 + $0x8] sm:$0xff]
  %v666 = vld [vmem:[%s15 + $0x10] sm:$0xff]
  %v667 = vld [vmem:[%s15 + $0x18] sm:$0xff]
  %v668 = vld [vmem:[%s15 + $0x20] sm:$0xff]
  %v669 = vld [vmem:[%s15 + $0x28] sm:$0xff]
  %v670 = vld [vmem:[%s15 + $0x30] sm:$0xff]
  %v671 = vld [vmem:[%s15 + $0x38] sm:$0xff]
  %v673 = vsel %vm405, %v655, 0
  %675 = vmatprep.subr.mxu0 0.0
  %676 = vmatpush1.msra.mxu0 %v664
  %677 = vmatprep.subr.mxu0 0.0
  %678 = vmatpush1.msra.mxu0 %v665
  %679 = vmatprep.subr.mxu0 0.0
  %680 = vmatpush1.msra.mxu0 %v666
  %681 = vmatprep.subr.mxu0 0.0
  %682 = vmatpush1.msra.mxu0 %v667
  %683 = vmatprep.subr.mxu0 0.0
  %684 = vmatpush1.msra.mxu0 %v668
  %685 = vmatprep.subr.mxu0 0.0
  %686 = vmatpush1.msra.mxu0 %v669
  %687 = vmatprep.subr.mxu0 0.0
  %688 = vmatpush1.msra.mxu0 %v670
  %689 = vmatprep.subr.mxu0 0.0
  %690 = vmatpush1.msra.mxu0 %v671
  %691 = vmatprep.subr.mxu0 0.0
  %692 = vmatpush1.msra.mxu0 0.0
  %693 = vmatprep.subr.mxu0 0.0
  %694 = vmatpush1.msra.mxu0 0.0
  %695 = vmatprep.subr.mxu0 0.0
  %696 = vmatpush1.msra.mxu0 0.0
  %697 = vmatprep.subr.mxu0 0.0
  %698 = vmatpush1.msra.mxu0 0.0
  %699 = vmatprep.subr.mxu0 0.0
  %700 = vmatpush1.msra.mxu0 0.0
  %701 = vmatprep.subr.mxu0 0.0
  %702 = vmatpush1.msra.mxu0 0.0
  %703 = vmatprep.subr.mxu0 0.0
  %704 = vmatpush1.msra.mxu0 0.0
  %705 = vmatprep.subr.mxu0 0.0
  %706 = vmatpush1.msra.mxu0 0.0
  %707 = vmatprep.subr.mxu0 0.0
  %708 = vmatpush1.msra.mxu0 0.0
  %709 = vmatprep.subr.mxu0 0.0
  %710 = vmatpush1.msra.mxu0 0.0
  %711 = vmatprep.subr.mxu0 0.0
  %712 = vmatpush1.msra.mxu0 0.0
  %713 = vmatprep.subr.mxu0 0.0
  %714 = vmatpush1.msra.mxu0 0.0
  %715 = vmatprep.subr.mxu0 0.0
  %716 = vmatpush1.msra.mxu0 0.0
  %717 = vmatprep.subr.mxu0 0.0
  %718 = vmatpush1.msra.mxu0 0.0
  %719 = vmatprep.subr.mxu0 0.0
  %720 = vmatpush1.msra.mxu0 0.0
  %721 = vmatprep.subr.mxu0 0.0
  %722 = vmatpush1.msra.mxu0 0.0
  %723 = vmatprep.subr.mxu0 0.0
  %724 = vmatpush1.msra.mxu0 0.0
  %725 = vmatprep.subr.mxu0 0.0
  %726 = vmatpush1.msra.mxu0 0.0
  %727 = vmatprep.subr.mxu0 0.0
  %728 = vmatpush1.msra.mxu0 0.0
  %729 = vmatprep.subr.mxu0 0.0
  %730 = vmatpush1.msra.mxu0 0.0
  %731 = vmatprep.subr.mxu0 0.0
  %732 = vmatpush1.msra.mxu0 0.0
  %733 = vmatprep.subr.mxu0 0.0
  %734 = vmatpush1.msra.mxu0 0.0
  %735 = vmatprep.subr.mxu0 0.0
  %736 = vmatpush1.msra.mxu0 0.0
  %737 = vmatprep.subr.mxu0 0.0
  %738 = vmatpush1.msra.mxu0 0.0
  %739 = vmatprep.mubr.f32.mxu0 0.0
  %740 = vmatmul.mubr.f32.gmra.mrb[0].mxu0 %v673
  %v741 = vpop.f32.mrb[0].mxu0
  %v742 = vadd.f32 0.0, %v741
  %v743 = vpop.f32.mrb[0].mxu0
  %744 = vdwg.mxu0
  %v746 = vsel %vm405, %v388, 0
  %748 = vmatprep.subr.mxu0 0.0
  %749 = vmatpush1.msra.mxu0 %v656
  %750 = vmatprep.subr.mxu0 0.0
  %751 = vmatpush1.msra.mxu0 %v657
  %752 = vmatprep.subr.mxu0 0.0
  %753 = vmatpush1.msra.mxu0 %v658
  %754 = vmatprep.subr.mxu0 0.0
  %755 = vmatpush1.msra.mxu0 %v659
  %756 = vmatprep.subr.mxu0 0.0
  %757 = vmatpush1.msra.mxu0 %v660
  %758 = vmatprep.subr.mxu0 0.0
  %759 = vmatpush1.msra.mxu0 %v661
  %760 = vmatprep.subr.mxu0 0.0
  %761 = vmatpush1.msra.mxu0 %v662
  %762 = vmatprep.subr.mxu0 0.0
  %763 = vmatpush1.msra.mxu0 %v663
  %764 = vmatprep.subr.mxu0 0.0
  %765 = vmatpush1.msra.mxu0 0.0
  %766 = vmatprep.subr.mxu0 0.0
  %767 = vmatpush1.msra.mxu0 0.0
  %768 = vmatprep.subr.mxu0 0.0
  %769 = vmatpush1.msra.mxu0 0.0
  %770 = vmatprep.subr.mxu0 0.0
  %771 = vmatpush1.msra.mxu0 0.0
  %772 = vmatprep.subr.mxu0 0.0
  %773 = vmatpush1.msra.mxu0 0.0
  %774 = vmatprep.subr.mxu0 0.0
  %775 = vmatpush1.msra.mxu0 0.0
  %776 = vmatprep.subr.mxu0 0.0
  %777 = vmatpush1.msra.mxu0 0.0
  %778 = vmatprep.subr.mxu0 0.0
  %779 = vmatpush1.msra.mxu0 0.0
  %780 = vmatprep.subr.mxu0 0.0
  %781 = vmatpush1.msra.mxu0 0.0
  %782 = vmatprep.subr.mxu0 0.0
  %783 = vmatpush1.msra.mxu0 0.0
  %784 = vmatprep.subr.mxu0 0.0
  %785 = vmatpush1.msra.mxu0 0.0
  %786 = vmatprep.subr.mxu0 0.0
  %787 = vmatpush1.msra.mxu0 0.0
  %788 = vmatprep.subr.mxu0 0.0
  %789 = vmatpush1.msra.mxu0 0.0
  %790 = vmatprep.subr.mxu0 0.0
  %791 = vmatpush1.msra.mxu0 0.0
  %792 = vmatprep.subr.mxu0 0.0
  %793 = vmatpush1.msra.mxu0 0.0
  %794 = vmatprep.subr.mxu0 0.0
  %795 = vmatpush1.msra.mxu0 0.0
  %796 = vmatprep.subr.mxu0 0.0
  %797 = vmatpush1.msra.mxu0 0.0
  %798 = vmatprep.subr.mxu0 0.0
  %799 = vmatpush1.msra.mxu0 0.0
  %800 = vmatprep.subr.mxu0 0.0
  %801 = vmatpush1.msra.mxu0 0.0
  %802 = vmatprep.subr.mxu0 0.0
  %803 = vmatpush1.msra.mxu0 0.0
  %804 = vmatprep.subr.mxu0 0.0
  %805 = vmatpush1.msra.mxu0 0.0
  %806 = vmatprep.subr.mxu0 0.0
  %807 = vmatpush1.msra.mxu0 0.0
  %808 = vmatprep.subr.mxu0 0.0
  %809 = vmatpush1.msra.mxu0 0.0
  %810 = vmatprep.subr.mxu0 0.0
  %811 = vmatpush1.msra.mxu0 0.0
  %812 = vmatprep.mubr.f32.mxu0 0.0
  %813 = vmatmul.mubr.f32.gmra.mrb[0].mxu0 %v746
  %v814 = vpop.f32.mrb[0].mxu0
  %v815 = vadd.f32 %v742, %v814
  %v816 = vpop.f32.mrb[0].mxu0
  %817 = vdwg.mxu0
  %v818 = vld [vmem:[%s16] sm:$0x1]
  %v820 = vlaneseq
  %v821 = vshrl.u32 %v820, 7
  %v822 = vsub.s32 0, %v821
  %v823 = vrot.slane %v818, %v822
  %v825 = vadd.f32 %v815, %v823
  %vm826 = vcmp.gt.f32.partialorder %v825, 0.0
  %v827 = vmul.f32 %v825, 0.01
  %v828 = vsel %vm826, %v825, %v827
  %v829 = vld [vmem:[%s17] sm:$0xff]
  %v830 = vld [vmem:[%s17 + $0x8] sm:$0xff]
  %v831 = vld [vmem:[%s17 + $0x10] sm:$0xff]
  %v832 = vld [vmem:[%s17 + $0x18] sm:$0xff]
  %v833 = vld [vmem:[%s17 + $0x20] sm:$0xff]
  %v834 = vld [vmem:[%s17 + $0x28] sm:$0xff]
  %v835 = vld [vmem:[%s17 + $0x30] sm:$0xff]
  %v836 = vld [vmem:[%s17 + $0x38] sm:$0xff]
  %v838 = vsel %vm405, %v828, 0
  %840 = vmatprep.subr.mxu0 0.0
  %841 = vmatpush1.msra.mxu0 %v829
  %842 = vmatprep.subr.mxu0 0.0
  %843 = vmatpush1.msra.mxu0 %v830
  %844 = vmatprep.subr.mxu0 0.0
  %845 = vmatpush1.msra.mxu0 %v831
  %846 = vmatprep.subr.mxu0 0.0
  %847 = vmatpush1.msra.mxu0 %v832
  %848 = vmatprep.subr.mxu0 0.0
  %849 = vmatpush1.msra.mxu0 %v833
  %850 = vmatprep.subr.mxu0 0.0
  %851 = vmatpush1.msra.mxu0 %v834
  %852 = vmatprep.subr.mxu0 0.0
  %853 = vmatpush1.msra.mxu0 %v835
  %854 = vmatprep.subr.mxu0 0.0
  %855 = vmatpush1.msra.mxu0 %v836
  %856 = vmatprep.subr.mxu0 0.0
  %857 = vmatpush1.msra.mxu0 0.0
  %858 = vmatprep.subr.mxu0 0.0
  %859 = vmatpush1.msra.mxu0 0.0
  %860 = vmatprep.subr.mxu0 0.0
  %861 = vmatpush1.msra.mxu0 0.0
  %862 = vmatprep.subr.mxu0 0.0
  %863 = vmatpush1.msra.mxu0 0.0
  %864 = vmatprep.subr.mxu0 0.0
  %865 = vmatpush1.msra.mxu0 0.0
  %866 = vmatprep.subr.mxu0 0.0
  %867 = vmatpush1.msra.mxu0 0.0
  %868 = vmatprep.subr.mxu0 0.0
  %869 = vmatpush1.msra.mxu0 0.0
  %870 = vmatprep.subr.mxu0 0.0
  %871 = vmatpush1.msra.mxu0 0.0
  %872 = vmatprep.subr.mxu0 0.0
  %873 = vmatpush1.msra.mxu0 0.0
  %874 = vmatprep.subr.mxu0 0.0
  %875 = vmatpush1.msra.mxu0 0.0
  %876 = vmatprep.subr.mxu0 0.0
  %877 = vmatpush1.msra.mxu0 0.0
  %878 = vmatprep.subr.mxu0 0.0
  %879 = vmatpush1.msra.mxu0 0.0
  %880 = vmatprep.subr.mxu0 0.0
  %881 = vmatpush1.msra.mxu0 0.0
  %882 = vmatprep.subr.mxu0 0.0
  %883 = vmatpush1.msra.mxu0 0.0
  %884 = vmatprep.subr.mxu0 0.0
  %885 = vmatpush1.msra.mxu0 0.0
  %886 = vmatprep.subr.mxu0 0.0
  %887 = vmatpush1.msra.mxu0 0.0
  %888 = vmatprep.subr.mxu0 0.0
  %889 = vmatpush1.msra.mxu0 0.0
  %890 = vmatprep.subr.mxu0 0.0
  %891 = vmatpush1.msra.mxu0 0.0
  %892 = vmatprep.subr.mxu0 0.0
  %893 = vmatpush1.msra.mxu0 0.0
  %894 = vmatprep.subr.mxu0 0.0
  %895 = vmatpush1.msra.mxu0 0.0
  %896 = vmatprep.subr.mxu0 0.0
  %897 = vmatpush1.msra.mxu0 0.0
  %898 = vmatprep.subr.mxu0 0.0
  %899 = vmatpush1.msra.mxu0 0.0
  %900 = vmatprep.subr.mxu0 0.0
  %901 = vmatpush1.msra.mxu0 0.0
  %902 = vmatprep.subr.mxu0 0.0
  %903 = vmatpush1.msra.mxu0 0.0
  %904 = vmatprep.mubr.f32.mxu0 0.0
  %905 = vmatmul.mubr.f32.gmra.mrb[0].mxu0 %v838
  %v906 = vpop.f32.mrb[0].mxu0
  %v907 = vadd.f32 0.0, %v906
  %v908 = vpop.f32.mrb[0].mxu0
  %909 = vdwg.mxu0
  %910 = vst.msk [vmem:[%s18] sm:$0xff] %vm405, %v388
  %911 = vrot.lane.b32.xlu0 %v655, 64
  %v912 = vpop.permute.xlu0 %911
  %vm914 = vcmask 1048064
  %915 = vst.msk [vmem:[%s18] sm:$0xff] %vm914, %v912
  %916 = vst.msk [vmem:[%s18 + $0x8] sm:$0xff] %vm405, %v828
  %918 = vrot.lane.b32.xlu0 %v907, 64
  %v919 = vpop.permute.xlu0 %918
  %921 = vst.msk [vmem:[%s18 + $0x8] sm:$0xff] %vm914, %v919
  // Predicated region
  $region74: #{naive_dl_forward.1} parent=0 // pred_check
    _
  $region75: #{naive_dl_forward.1} parent=0 // pred_check_branch
    %923 = sbr.rel (0) target = $region77
  $region76: #{naive_dl_forward.1} parent=0 // pred_region
    _
  $region77: #{naive_dl_forward.1} parent=0 // pred_fallthru
    _
  // Predicated region
  $region78: #{naive_dl_forward.1} parent=0 // pred_check
    _
  $region79: #{naive_dl_forward.1} parent=0 // pred_check_branch
    %925 = sbr.rel (0) target = $region81
  $region80: #{naive_dl_forward.1} parent=0 // pred_region
    _
  $region81: #{naive_dl_forward.1} parent=0 // pred_fallthru
    _

</llo_original>
